<compile_context>
chip_gen: v7x
topology: tpu7x:2x2x1
jax: 0.10.0
libtpu: 0.0.40
codegen_flags: <defaults>
</compile_context>

<pallas_src>
import functools
import math

import jax
import jax.numpy as jnp
from jax.experimental import pallas as pl
from jax.experimental.pallas import tpu as pltpu


# --------------------------------------------------------------------------
# Generation-aware configuration
# --------------------------------------------------------------------------

def _vmem_capacity_bytes():
    try:
        return int(pltpu.get_tpu_info().vmem_capacity_bytes)
    except Exception:
        return 64 * 1024 * 1024   # conservative (v7x per-TC VMEM)


_BIG_VMEM = _vmem_capacity_bytes() >= 100 * 1024 * 1024    # v5e/v6e: 128 MiB, v7x: 64 MiB
_VMEM_LIMIT = (96 if _BIG_VMEM else 48) * 1024 * 1024
_TM_FFN = 512 if _BIG_VMEM else 256      # FFN row tile: (TM, Dff) f32 intermediate must fit
_TM_MEM = 1024 if _BIG_VMEM else 512     # pure mem-bound kernels (final LayerNorm)

# pipeline_mode=pl.Buffered(1) for constant-index blocks (fetched once; no point
# double-buffering).  Feature-tested so older JAX without pipeline_mode still runs.
try:
    pl.BlockSpec((8, 128), lambda i: (0, 0), pipeline_mode=pl.Buffered(1))
    _SINGLE_BUFFER = pl.Buffered(1)
except Exception:
    _SINGLE_BUFFER = None


def _cp(sem):
    return pltpu.CompilerParams(dimension_semantics=sem, vmem_limit_bytes=_VMEM_LIMIT)


def _const_spec(block_shape):
    """BlockSpec for a weight/bias that is identical for every grid step."""
    nd = len(block_shape)
    idx = lambda *_: (0,) * nd
    if _SINGLE_BUFFER is not None:
        return pl.BlockSpec(block_shape, idx, pipeline_mode=_SINGLE_BUFFER)
    return pl.BlockSpec(block_shape, idx)


def _pick_tile(dim, pref, align):
    """Largest tile <= pref, multiple of `align`, that evenly divides dim.
    Falls back to the full dim (always a legal BlockSpec block size)."""
    if dim <= pref:
        return dim
    t = (pref // align) * align
    while t >= align:
        if dim % t == 0:
            return t
        t -= align
    return dim


# --------------------------------------------------------------------------
# Kernels
# --------------------------------------------------------------------------

def _embed_pe_kernel(x_ref, w_ref, b_ref, pe_ref, o_ref):
    """Fused: frames @ W_embed + bias + positional encoding (weight fetched once)."""
    o_ref[0] = (jnp.dot(x_ref[0].astype(jnp.bfloat16), w_ref[...],
                        preferred_element_type=jnp.float32)
                + b_ref[...] + pe_ref[...])


def embed_pe_pallas(frames, w, b, pe):
    B, S, Dv = frames.shape
    H = w.shape[1]
    TS = _pick_tile(S, 256, 8)
    # Weight at constant block index -> DMA'd once (2 MiB bf16 at 2048x512), no K tiling.
    return pl.pallas_call(
        _embed_pe_kernel,
        out_shape=jax.ShapeDtypeStruct((B, S, H), jnp.float32),
        grid=(B, S // TS),
        in_specs=[
            pl.BlockSpec((1, TS, Dv), lambda b, s: (b, s, 0)),
            _const_spec((Dv, H)),
            _const_spec((1, H)),
            pl.BlockSpec((TS, H), lambda b, s: (s, 0)),
        ],
        out_specs=pl.BlockSpec((1, TS, H), lambda b, s: (b, s, 0)),
        compiler_params=_cp(("parallel", "parallel")),
    )(frames, w.astype(jnp.bfloat16), b.reshape(1, H), pe)


def _attn_sublayer_kernel(x_ref, g_ref, bn_ref, wqkv_ref, bqkv_ref, wo_ref, bo_ref,
                          mb_ref, o_ref, *, heads, eps):
    """Fully fused attention sublayer for one batch element:
         out = x + MHSA(LN(x)) @ Wo + bo
    The (S, 3H) QKV tensor and the per-head outputs stay in VMEM/vregs — no HBM
    round trips.  1/sqrt(head_dim) is pre-folded into the Q columns of wqkv/bqkv."""
    x = x_ref[0]                                    # (S, H) f32 residual stream
    H = x.shape[-1]
    Dh = H // heads

    mu = jnp.mean(x, axis=-1, keepdims=True)
    var = jnp.mean(jnp.square(x - mu), axis=-1, keepdims=True)
    xn = (x - mu) * jax.lax.rsqrt(var + eps) * g_ref[...] + bn_ref[...]

    qkv = jnp.dot(xn.astype(jnp.bfloat16), wqkv_ref[...],
                  preferred_element_type=jnp.float32) + bqkv_ref[...]   # (S, 3H)

    mb = mb_ref[0]                                  # (1, S): 0 valid / -1e9 padded keys
    acc = x + bo_ref[...]                           # residual + output bias
    for h in range(heads):
        lo = h * Dh
        qh = qkv[:, lo:lo + Dh].astype(jnp.bfloat16)              # scale already folded
        kh = qkv[:, H + lo:H + lo + Dh].astype(jnp.bfloat16)
        vh = qkv[:, 2 * H + lo:2 * H + lo + Dh].astype(jnp.bfloat16)
        s = jax.lax.dot_general(qh, kh, (((1,), (1,)), ((), ())),
                                preferred_element_type=jnp.float32) + mb   # (S, S)
        s = s - jnp.max(s, axis=-1, keepdims=True)
        p = jnp.exp(s)
        inv = pl.reciprocal(jnp.sum(p, axis=-1, keepdims=True), approx=True)
        oh = jax.lax.dot_general(p.astype(jnp.bfloat16), vh,
                                 (((1,), (0,)), ((), ())),
                                 preferred_element_type=jnp.float32) * inv  # (S, Dh)
        # Consume each head immediately: accumulate its slice of the output projection.
        acc = acc + jax.lax.dot_general(oh.astype(jnp.bfloat16),
                                        wo_ref[lo:lo + Dh, :],
                                        (((1,), (0,)), ((), ())),
                                        preferred_element_type=jnp.float32)
    o_ref[0] = acc


def attn_sublayer_pallas(x, gamma, beta, wqkv, bqkv, wo, bo, mask_bias, heads, eps=1e-5):
    """x: (B, S, H) f32 residual stream -> (B, S, H) f32."""
    B, S, H = x.shape
    Dh = H // heads
    scale = 1.0 / math.sqrt(Dh)
    # Fold 1/sqrt(head_dim) into the Q columns of the fused QKV projection (free).
    qscale = jnp.concatenate([jnp.full((H,), scale, jnp.float32),
                              jnp.ones((2 * H,), jnp.float32)])
    wqkv_s = (wqkv * qscale[None, :]).astype(jnp.bfloat16)
    bqkv_s = (bqkv * qscale).reshape(1, 3 * H)

    kern = functools.partial(_attn_sublayer_kernel, heads=heads, eps=eps)
    x_blk = pl.BlockSpec((1, S, H), lambda b: (b, 0, 0))
    # TODO(synk): for sequences much longer than max_video_len=100, tile the grid over
    # (B, q-tiles) flash-attention style; at S<=100 the full (S,S) score tile is tiny.
    return pl.pallas_call(
        kern,
        out_shape=jax.ShapeDtypeStruct((B, S, H), jnp.float32),
        grid=(B,),
        in_specs=[
            x_blk,
            _const_spec((1, H)),            # gamma
            _const_spec((1, H)),            # beta
            _const_spec((H, 3 * H)),        # wqkv (bf16, Q-scaled)
            _const_spec((1, 3 * H)),        # bqkv
            _const_spec((H, H)),            # wo (bf16)
            _const_spec((1, H)),            # bo
            pl.BlockSpec((1, 1, S), lambda b: (b, 0, 0)),   # additive key mask
        ],
        out_specs=x_blk,
        compiler_params=_cp(("parallel",)),
    )(x, gamma.reshape(1, H), beta.reshape(1, H), wqkv_s, bqkv_s,
      wo.astype(jnp.bfloat16), bo.reshape(1, H), mask_bias)


def _ln_ffn_residual_kernel(x_ref, g_ref, bn_ref, w1_ref, b1_ref, w2_ref, b2_ref,
                            o_ref, *, eps):
    """Fused: x + W2 @ relu(W1 @ LN(x) + b1) + b2 (single HBM read of x, single write)."""
    x = x_ref[...]
    mu = jnp.mean(x, axis=-1, keepdims=True)
    var = jnp.mean(jnp.square(x - mu), axis=-1, keepdims=True)
    xn = (x - mu) * jax.lax.rsqrt(var + eps) * g_ref[...] + bn_ref[...]
    h = jnp.dot(xn.astype(jnp.bfloat16), w1_ref[...],
                preferred_element_type=jnp.float32) + b1_ref[...]
    h = jnp.maximum(h, 0.0)
    o_ref[...] = jnp.dot(h.astype(jnp.bfloat16), w2_ref[...],
                         preferred_element_type=jnp.float32) + b2_ref[...] + x


def ln_ffn_residual_pallas(x2d, gamma, beta, w1, b1, w2, b2, eps=1e-5):
    M, H = x2d.shape
    Dff = w1.shape[1]
    TM = _pick_tile(M, _TM_FFN, 8)   # 512 on v5e/v6e (128 MiB VMEM), 256 on v7x
    kern = functools.partial(_ln_ffn_residual_kernel, eps=eps)
    return pl.pallas_call(
        kern,
        out_shape=jax.ShapeDtypeStruct((M, H), jnp.float32),
        grid=(M // TM,),
        in_specs=[pl.BlockSpec((TM, H), lambda i: (i, 0)),
                  _const_spec((1, H)),
                  _const_spec((1, H)),
                  _const_spec((H, Dff)),
                  _const_spec((1, Dff)),
                  _const_spec((Dff, H)),
                  _const_spec((1, H))],
        out_specs=pl.BlockSpec((TM, H), lambda i: (i, 0)),
        compiler_params=_cp(("parallel",)),
    )(x2d, gamma.reshape(1, H), beta.reshape(1, H),
      w1.astype(jnp.bfloat16), b1.reshape(1, Dff),
      w2.astype(jnp.bfloat16), b2.reshape(1, H))


def _layernorm_kernel(x_ref, g_ref, b_ref, o_ref, *, eps):
    x = x_ref[...]
    mu = jnp.mean(x, axis=-1, keepdims=True)
    var = jnp.mean(jnp.square(x - mu), axis=-1, keepdims=True)
    o_ref[...] = (x - mu) * jax.lax.rsqrt(var + eps) * g_ref[...] + b_ref[...]


def layernorm_pallas(x2d, gamma, beta, eps=1e-5):
    M, D = x2d.shape
    TM = _pick_tile(M, _TM_MEM, 8)   # mem-bound: big tiles for HBM-roofline efficiency
    kern = functools.partial(_layernorm_kernel, eps=eps)
    return pl.pallas_call(
        kern,
        out_shape=jax.ShapeDtypeStruct((M, D), jnp.float32),
        grid=(M // TM,),
        in_specs=[pl.BlockSpec((TM, D), lambda i: (i, 0)),
                  _const_spec((1, D)),
                  _const_spec((1, D))],
        out_specs=pl.BlockSpec((TM, D), lambda i: (i, 0)),
        compiler_params=_cp(("parallel",)),
    )(x2d, gamma.reshape(1, D), beta.reshape(1, D))


# --------------------------------------------------------------------------
# Parameters, positional encoding, forward orchestration
# --------------------------------------------------------------------------

def sinusoidal_pe(S, D):
    pos = jnp.arange(S, dtype=jnp.float32)[:, None]
    i = jnp.arange(D // 2, dtype=jnp.float32)[None, :]
    angle = pos / jnp.power(10000.0, 2.0 * i / D)
    pe = jnp.zeros((S, D), jnp.float32)
    pe = pe.at[:, 0::2].set(jnp.sin(angle))
    pe = pe.at[:, 1::2].set(jnp.cos(angle))
    return pe


def init_params(key, vid_dim, hidden, layers, d_ff):
    def dense(k, din, dout):
        kw, kb = jax.random.split(k)
        w = jax.random.normal(kw, (din, dout), jnp.float32) * (1.0 / math.sqrt(din))
        b = jax.random.normal(kb, (dout,), jnp.float32) * 0.01
        return w, b

    keys = jax.random.split(key, 1 + layers)
    params = {
        'embed': dense(keys[0], vid_dim, hidden),
        'final_norm': (jnp.ones((hidden,), jnp.float32),
                       jnp.zeros((hidden,), jnp.float32)),
        'layers': [],
    }
    for l in range(layers):
        ks = jax.random.split(keys[1 + l], 4)
        wqkv, bqkv = dense(ks[0], hidden, 3 * hidden)   # fused Q|K|V projection
        wo, bo = dense(ks[1], hidden, hidden)
        w1, b1 = dense(ks[2], hidden, d_ff)
        w2, b2 = dense(ks[3], d_ff, hidden)
        params['layers'].append(dict(
            norm1=(jnp.ones((hidden,), jnp.float32), jnp.zeros((hidden,), jnp.float32)),
            wqkv=wqkv, bqkv=bqkv, wo=wo, bo=bo,
            norm2=(jnp.ones((hidden,), jnp.float32), jnp.zeros((hidden,), jnp.float32)),
            w1=w1, b1=b1, w2=w2, b2=b2,
        ))
    return params


def frames_encoder_forward(frames, flengths, params, heads):
    """frames: (B, S, vid_dim) float32; flengths: (B,) int32.  Returns (B, S, hidden)."""
    B, S, _ = frames.shape
    H = params['embed'][0].shape[1]

    # attn_mask(flengths, max_len=S).unsqueeze(-2), as an additive bias (0 / -1e9)
    valid = jnp.arange(S)[None, :] < flengths[:, None]
    mask_bias = jnp.where(valid, 0.0, -1e9).astype(jnp.float32)[:, None, :]   # (B, 1, S)

    # TODO(synk): trans_encoder's source is external to the reference file; the body below
    # is a standard pre-norm Transformer encoder reconstruction (dropout omitted for
    # eval-mode determinism; org_key/select extras not returned).
    pe = sinusoidal_pe(S, H)
    w_e, b_e = params['embed']
    x = embed_pe_pallas(frames, w_e, b_e, pe)          # (B, S, H), bias+PE fused

    for lp in params['layers']:
        # --- self-attention sublayer, fully fused (LN+QKV+MHSA+WO+residual) ---
        g1, be1 = lp['norm1']
        x = attn_sublayer_pallas(x, g1, be1, lp['wqkv'], lp['bqkv'],
                                 lp['wo'], lp['bo'], mask_bias, heads)

        # --- feed-forward sublayer: x + FFN(LN(x)), fully fused ---
        g2, be2 = lp['norm2']
        x = ln_ffn_residual_pallas(x.reshape(B * S, H), g2, be2,
                                   lp['w1'], lp['b1'], lp['w2'], lp['b2']).reshape(B, S, H)

    gf, bf = params['final_norm']
    return layernorm_pallas(x.reshape(B * S, H), gf, bf).reshape(B, S, H)


if __name__ == "__main__":
    # Small shapes consistent with the module (vid_dim/hidden scaled down from 2048/512).
    B, S = 2, 8
    VID_DIM, HIDDEN, LAYERS, HEADS = 64, 32, 3, 4
    D_FF = 4 * HIDDEN

    key = jax.random.PRNGKey(0)
    k_frames, k_params = jax.random.split(key)
    frames = jax.random.normal(k_frames, (B, S, VID_DIM), jnp.float32)
    flengths = jnp.array([8, 5], dtype=jnp.int32)   # variable-length videos

    params = init_params(k_params, VID_DIM, HIDDEN, LAYERS, D_FF)
    out = frames_encoder_forward(frames, flengths, params, HEADS)
    out = jax.block_until_ready(out)
    assert out.shape == (B, S, HIDDEN) and out.dtype == jnp.float32
    assert bool(jnp.all(jnp.isfinite(out)))
    print("KERNEL_OK")
</pallas_src>

<mosaic_0001>
module attributes {stable_mosaic.version = 11 : i64} {
  func.func @_embed_pe_kernel(%arg0: i32, %arg1: i32, %arg2: memref<1x8x64xf32, #tpu.memory_space<vmem>>, %arg3: memref<64x32xbf16, #tpu.memory_space<vmem>>, %arg4: memref<1x32xf32, #tpu.memory_space<vmem>>, %arg5: memref<8x32xf32, #tpu.memory_space<vmem>>, %arg6: memref<1x8x32xf32, #tpu.memory_space<vmem>>) attributes {dimension_semantics = [#tpu.dimension_semantics<parallel>, #tpu.dimension_semantics<parallel>], iteration_bounds = array<i64: 2, 1>, scalar_prefetch = 0 : i64, scratch_operands = 0 : i64, tpu.core_type = #tpu.core_type<tc>, window_params = [{transform_indices = @transform_0, window_bounds = array<i64: 1, 8, 64>}, {pipeline_mode = #tpu.pipeline_mode<synchronous>, transform_indices = @transform_1, window_bounds = array<i64: 64, 32>}, {pipeline_mode = #tpu.pipeline_mode<synchronous>, transform_indices = @transform_2, window_bounds = array<i64: 1, 32>}, {transform_indices = @transform_3, window_bounds = array<i64: 8, 32>}, {transform_indices = @transform_4, window_bounds = array<i64: 1, 8, 32>}]} {
    %c0 = arith.constant 0 : index
    %c0_0 = arith.constant 0 : index
    %c0_1 = arith.constant 0 : index
    %0 = vector.load %arg2[%c0, %c0_0, %c0_1] : memref<1x8x64xf32, #tpu.memory_space<vmem>>, vector<1x8x64xf32>
    %1 = vector.shape_cast %0 : vector<1x8x64xf32> to vector<8x64xf32>
    %2 = arith.truncf %1 : vector<8x64xf32> to vector<8x64xbf16>
    %c0_2 = arith.constant 0 : index
    %c0_3 = arith.constant 0 : index
    %3 = vector.load %arg3[%c0_2, %c0_3] : memref<64x32xbf16, #tpu.memory_space<vmem>>, vector<64x32xbf16>
    %cst = arith.constant dense<0.000000e+00> : vector<8x32xf32>
    %4 = tpu.matmul %2, %3, %cst {dimension_numbers = #tpu.dot_dimension_numbers<[1], [0], [0], [1], [0, 0, 1, 1], [], []>} : vector<8x64xbf16>, vector<64x32xbf16>, vector<8x32xf32> -> vector<8x32xf32>
    %c0_4 = arith.constant 0 : index
    %c0_5 = arith.constant 0 : index
    %5 = vector.load %arg4[%c0_4, %c0_5] : memref<1x32xf32, #tpu.memory_space<vmem>>, vector<1x32xf32>
    %6 = vector.broadcast %5 : vector<1x32xf32> to vector<8x32xf32>
    %7 = arith.addf %4, %6 : vector<8x32xf32>
    %c0_6 = arith.constant 0 : index
    %c0_7 = arith.constant 0 : index
    %8 = vector.load %arg5[%c0_6, %c0_7] : memref<8x32xf32, #tpu.memory_space<vmem>>, vector<8x32xf32>
    %9 = arith.addf %7, %8 : vector<8x32xf32>
    %c0_8 = arith.constant 0 : index
    %c0_9 = arith.constant 0 : index
    %c0_10 = arith.constant 0 : index
    %10 = vector.load %arg6[%c0_8, %c0_9, %c0_10] : memref<1x8x32xf32, #tpu.memory_space<vmem>>, vector<1x8x32xf32>
    %11 = vector.shape_cast %10 : vector<1x8x32xf32> to vector<8x32xf32>
    %12 = vector.shape_cast %9 : vector<8x32xf32> to vector<1x8x32xf32>
    tpu.vector_store %arg6[%c0_8, %c0_9, %c0_10], %12 {strides = array<i32>} : memref<1x8x32xf32, #tpu.memory_space<vmem>>, vector<1x8x32xf32>,
    return
  }
  func.func @transform_0(%arg0: i32, %arg1: i32) -> (i32, i32, i32) {
    %c0_i32 = arith.constant 0 : i32
    %c0_i32_0 = arith.constant 0 : i32
    return %arg0, %arg1, %c0_i32 : i32, i32, i32
  }
  func.func @transform_1(%arg0: i32, %arg1: i32) -> (i32, i32) {
    %c0_i32 = arith.constant 0 : i32
    %c0_i32_0 = arith.constant 0 : i32
    %c0_i32_1 = arith.constant 0 : i32
    return %c0_i32, %c0_i32_0 : i32, i32
  }
  func.func @transform_2(%arg0: i32, %arg1: i32) -> (i32, i32) {
    %c0_i32 = arith.constant 0 : i32
    %c0_i32_0 = arith.constant 0 : i32
    %c0_i32_1 = arith.constant 0 : i32
    return %c0_i32, %c0_i32_0 : i32, i32
  }
  func.func @transform_3(%arg0: i32, %arg1: i32) -> (i32, i32) {
    %c0_i32 = arith.constant 0 : i32
    %c0_i32_0 = arith.constant 0 : i32
    return %arg1, %c0_i32 : i32, i32
  }
  func.func @transform_4(%arg0: i32, %arg1: i32) -> (i32, i32, i32) {
    %c0_i32 = arith.constant 0 : i32
    %c0_i32_0 = arith.constant 0 : i32
    return %arg0, %arg1, %c0_i32 : i32, i32, i32
  }
}

</mosaic_0001>

<llo_original>
// kernel: tpu_custom_call.1
$region0: #{tpu_custom_call.1}
  #allocation0 [shape = 'u32[]', space=smem, size = 0x4, offset = 0x4, fixed_abs, tag = 'smem constant byte address 0x4 - core index']
  #allocation1 [shape = 'u32[144,128]{1,0:T(1,128)}', space=vmem, size = 0x12000, scoped, tag = 'internal scratch']
  %s0 = inlined_call_operand.vmem [shape: f32[2,8,64], index: 0, kind: input, shape index: {}]
  %s1 = inlined_call_operand.vmem [shape: bf16[64,32], index: 1, kind: input, shape index: {}]
  %s2 = inlined_call_operand.vmem [shape: f32[1,32], index: 2, kind: input, shape index: {}]
  %s3 = inlined_call_operand.vmem [shape: f32[8,32], index: 3, kind: input, shape index: {}]
  %s4 = inlined_call_operand.hbm [shape: f32[2,8,32], index: 4, kind: output, shape index: {}]
  %s5 = sld [smem:[#allocation0]]
  $region49: #{tpu_custom_call.1} parent=0
    _
  %s7 = ssub.s32 1, %s5
  %s8 = scalar_select 0, %s7, %s5
  $region1: #{tpu_custom_call.1} parent=0
    #allocation2 [shape = 'u8[8192]{0}', space=vmem, size = 0x2000, scoped, tag = 'output window, operand 0']
    #allocation3 [shape = 's32[2]{0}', space=sflag, size = 0x8, scoped, tag = 'scoped memory for tpu_custom_call.1']
    %9 = vsyncpa [#allocation3], 0
    %s10 = scalar_lea.sflag [#allocation3], 1
    %11 = vsyncpa %s10, 0
    loop: start=0, step=1, limit=4
    $region2: #{tpu_custom_call.1} parent=1 // loop_pre_header
      _
    $region3: #{tpu_custom_call.1} parent=1 // loop_header
      %s13 = sphi 0, %s17
      %p14 = scmp.ge.s32.totalorder %s13, 4
      %s20 = sphi 0, %s32
      %s21 = sphi 0, %s28
      %s22 = sphi 0, %s20
      %s23 = sphi 0, %s21
      %s24 = sphi 0, %s22
      %s25 = sphi 0, %s23
      %s37 = sphi 0, %s39
      %s40 = sphi 0, %s37
      %s41 = sphi 0, %s40
      %s57 = sphi 0, %s41
      %s61 = sphi 0, %s61
      %s63 = sphi 0, %s61
      %s64 = sphi 0, %s63
      %s78 = sphi 0, %s64
      %s82 = sphi 0, %s82
      %s84 = sphi 0, %s82
      %s85 = sphi 0, %s84
      %s99 = sphi 0, %s85
      %s105 = sphi 0, %s107
      %s108 = sphi 0, %s105
      %s109 = sphi 0, %s108
      %s125 = sphi 0, %s109
      %s133 = sphi 0, %s135
      %s136 = sphi 0, %s133
      %s137 = sphi 0, %s136
      %s153 = sphi 0, %s137
    $region4: #{tpu_custom_call.1} parent=1 // loop_header_branch
      %16 = sbr.rel (%p14) target = $region8
    $region5: #{tpu_custom_call.1} parent=1 // loop_body
      %s18 = ssub.s32 %s13, 1
      %s19 = ssub.s32 %s13, 2
      %s26 = sadd.s32 1, %s21
      %p27 = scmp.ge.s32.totalorder %s26, 1
      %s28 = scalar_select %p27, 0, %s26
      %s29 = sadd.s32 1, %s20
      %s30 = scalar_select %p27, %s29, %s20
      %p31 = scmp.ge.s32.totalorder %s30, 2
      %s32 = scalar_select %p31, 0, %s30
      %s33 = ssub.s32 %s20, %s32
      %s34 = ssub.s32 %s21, %s28
      %s35 = sor.u32 %s33, %s34
      %p36 = scmp.eq.s32.totalorder %s35, 0
      %s38 = sadd.s32 %s37, 1
      %s39 = scalar_select %p36, %s37, %s38
      %p42 = pneg %p36
      %p43 = scmp.eq.s32.totalorder %s13, 1
      %p44 = por %p42, %p43
      %p45 = scmp.ne.s32.totalorder %s37, %s40
      %p46 = scmp.eq.s32.totalorder %s13, 0
      %p47 = por %p45, %p46
      %p48 = scmp.ne.s32.totalorder %s37, %s40
      %p49 = scmp.eq.s32.totalorder %s18, 1
      %p50 = por %p48, %p49
      %p51 = scmp.ne.s32.totalorder %s40, %s41
      %p52 = scmp.eq.s32.totalorder %s18, 0
      %p53 = por %p51, %p52
      %p54 = scmp.ne.s32.totalorder %s40, %s41
      %p55 = scmp.eq.s32.totalorder %s19, 1
      %p56 = por %p54, %p55
      %p58 = scmp.ne.s32.totalorder %s41, %s57
      %p59 = scmp.eq.s32.totalorder %s19, 0
      %p60 = por %p58, %p59
      %s62 = sadd.s32 %s61, 1
      %p65 = scmp.eq.s32.totalorder %s13, 1
      %p66 = scmp.ne.s32.totalorder %s61, %s63
      %p67 = scmp.eq.s32.totalorder %s13, 0
      %p68 = por %p66, %p67
      %p69 = scmp.ne.s32.totalorder %s61, %s63
      %p70 = scmp.eq.s32.totalorder %s18, 1
      %p71 = por %p69, %p70
      %p72 = scmp.ne.s32.totalorder %s63, %s64
      %p73 = scmp.eq.s32.totalorder %s18, 0
      %p74 = por %p72, %p73
      %p75 = scmp.ne.s32.totalorder %s63, %s64
      %p76 = scmp.eq.s32.totalorder %s19, 1
      %p77 = por %p75, %p76
      %p79 = scmp.ne.s32.totalorder %s64, %s78
      %p80 = scmp.eq.s32.totalorder %s19, 0
      %p81 = por %p79, %p80
      %s83 = sadd.s32 %s82, 1
      %p86 = scmp.eq.s32.totalorder %s13, 1
      %p87 = scmp.ne.s32.totalorder %s82, %s84
      %p88 = scmp.eq.s32.totalorder %s13, 0
      %p89 = por %p87, %p88
      %p90 = scmp.ne.s32.totalorder %s82, %s84
      %p91 = scmp.eq.s32.totalorder %s18, 1
      %p92 = por %p90, %p91
      %p93 = scmp.ne.s32.totalorder %s84, %s85
      %p94 = scmp.eq.s32.totalorder %s18, 0
      %p95 = por %p93, %p94
      %p96 = scmp.ne.s32.totalorder %s84, %s85
      %p97 = scmp.eq.s32.totalorder %s19, 1
      %p98 = por %p96, %p97
      %p100 = scmp.ne.s32.totalorder %s85, %s99
      %p101 = scmp.eq.s32.totalorder %s19, 0
      %p102 = por %p100, %p101
      %s103 = ssub.s32 %s21, %s28
      %p104 = scmp.eq.s32.totalorder %s103, 0
      %s106 = sadd.s32 %s105, 1
      %s107 = scalar_select %p104, %s105, %s106
      %p110 = pneg %p104
      %p111 = scmp.eq.s32.totalorder %s13, 1
      %p112 = por %p110, %p111
      %p113 = scmp.ne.s32.totalorder %s105, %s108
      %p114 = scmp.eq.s32.totalorder %s13, 0
      %p115 = por %p113, %p114
      %p116 = scmp.ne.s32.totalorder %s105, %s108
      %p117 = scmp.eq.s32.totalorder %s18, 1
      %p118 = por %p116, %p117
      %p119 = scmp.ne.s32.totalorder %s108, %s109
      %p120 = scmp.eq.s32.totalorder %s18, 0
      %p121 = por %p119, %p120
      %p122 = scmp.ne.s32.totalorder %s108, %s109
      %p123 = scmp.eq.s32.totalorder %s19, 1
      %p124 = por %p122, %p123
      %p126 = scmp.ne.s32.totalorder %s109, %s125
      %p127 = scmp.eq.s32.totalorder %s19, 0
      %p128 = por %p126, %p127
      %s129 = ssub.s32 %s20, %s32
      %s130 = ssub.s32 %s21, %s28
      %s131 = sor.u32 %s129, %s130
      %p132 = scmp.eq.s32.totalorder %s131, 0
      %s134 = sadd.s32 %s133, 1
      %s135 = scalar_select %p132, %s133, %s134
      %p138 = pneg %p132
      %p139 = scmp.eq.s32.totalorder %s13, 1
      %p140 = por %p138, %p139
      %p141 = scmp.ne.s32.totalorder %s133, %s136
      %p142 = scmp.eq.s32.totalorder %s13, 0
      %p143 = por %p141, %p142
      %p144 = scmp.ne.s32.totalorder %s133, %s136
      %p145 = scmp.eq.s32.totalorder %s18, 1
      %p146 = por %p144, %p145
      %p147 = scmp.ne.s32.totalorder %s136, %s137
      %p148 = scmp.eq.s32.totalorder %s18, 0
      %p149 = por %p147, %p148
      %p150 = scmp.ne.s32.totalorder %s136, %s137
      %p151 = scmp.eq.s32.totalorder %s19, 1
      %p152 = por %p150, %p151
      %p154 = scmp.ne.s32.totalorder %s137, %s153
      %p155 = scmp.eq.s32.totalorder %s19, 0
      %p156 = por %p154, %p155
      %p157 = scmp.le.s32.totalorder 1, %s13
      %p158 = scmp.lt.s32.totalorder %s13, 3
      %p159 = pnand %p157, %p158
      %p160 = pneg %p159
      // Predicated region
      $region9: #{tpu_custom_call.1} parent=5 // pred_check
        _
      $region10: #{tpu_custom_call.1} parent=5 // pred_check_branch
        %162 = sbr.rel (%p159) target = $region12
      $region11: #{tpu_custom_call.1} parent=5 // pred_region
        %s163 = ssub.s32 %s13, 1
        // Predicated region
        $region13: #{tpu_custom_call.1} parent=11 // pred_check
          %p164 = pneg %p74
        $region14: #{tpu_custom_call.1} parent=11 // pred_check_branch
          %166 = sbr.rel (%p164) target = $region16
        $region15: #{tpu_custom_call.1} parent=11 // pred_region
          _
        $region16: #{tpu_custom_call.1} parent=11 // pred_fallthru
          _
        // Predicated region
        $region17: #{tpu_custom_call.1} parent=11 // pred_check
          %p167 = pneg %p95
        $region18: #{tpu_custom_call.1} parent=11 // pred_check_branch
          %169 = sbr.rel (%p167) target = $region20
        $region19: #{tpu_custom_call.1} parent=11 // pred_region
          _
        $region20: #{tpu_custom_call.1} parent=11 // pred_fallthru
          _
        // Predicated region
        $region21: #{tpu_custom_call.1} parent=11 // pred_check
          %p170 = pneg %p121
        $region22: #{tpu_custom_call.1} parent=11 // pred_check_branch
          %172 = sbr.rel (%p170) target = $region24
        $region23: #{tpu_custom_call.1} parent=11 // pred_region
          %p173 = scmp.lt.s32.totalorder %s23, 0
          %s174 = scalar_select %p173, %s23, 0
          %s175 = smul.addr %s174, 8
          %s176 = scalar_lea.vmem %s3, %s175
        $region24: #{tpu_custom_call.1} parent=11 // pred_fallthru
          _
      $region12: #{tpu_custom_call.1} parent=5 // pred_fallthru
        _
      %p177 = scmp.lt.s32.totalorder %s13, 2
      // Predicated region
      $region25: #{tpu_custom_call.1} parent=5 // pred_check
        %p178 = pneg %p177
      $region26: #{tpu_custom_call.1} parent=5 // pred_check_branch
        %180 = sbr.rel (%p178) target = $region28
      $region27: #{tpu_custom_call.1} parent=5 // pred_region
        // Predicated region
        $region29: #{tpu_custom_call.1} parent=27 // pred_check
          %p181 = pneg %p47
        $region30: #{tpu_custom_call.1} parent=27 // pred_check_branch
          %183 = sbr.rel (%p181) target = $region32
        $region31: #{tpu_custom_call.1} parent=27 // pred_region
          %p184 = scmp.lt.s32.totalorder %s20, 1
          %s185 = scalar_select %p184, %s20, 1
          %p186 = scmp.lt.s32.totalorder %s21, 0
          %s187 = scalar_select %p186, %s21, 0
          %s188 = sadd.s32 %s187, %s185
          %s189 = smul.addr %s188, 8
          %s190 = scalar_lea.vmem %s0, %s189
        $region32: #{tpu_custom_call.1} parent=27 // pred_fallthru
          _
      $region28: #{tpu_custom_call.1} parent=5 // pred_fallthru
        _
      %p191 = scmp.le.s32.totalorder 1, %s13
      %p192 = scmp.lt.s32.totalorder %s13, 3
      %p193 = pnand %p191, %p192
      %p194 = pneg %p193
      // Predicated region
      $region33: #{tpu_custom_call.1} parent=5 // pred_check
        _
      $region34: #{tpu_custom_call.1} parent=5 // pred_check_branch
        %196 = sbr.rel (%p193) target = $region36
      $region35: #{tpu_custom_call.1} parent=5 // pred_region
        %s197 = ssub.s32 %s13, 1
        %p198 = scmp.lt.s32.totalorder %s22, 1
        %s199 = scalar_select %p198, %s22, 1
        %p200 = scmp.lt.s32.totalorder %s23, 0
        %s201 = scalar_select %p200, %s23, 0
        %s202 = sadd.s32 %s201, %s199
        %s203 = smul.addr %s202, 8
        %s204 = scalar_lea.vmem %s0, %s203
        %p205 = pneg %p53
        %p206 = pneg %p50
        %p207 = pneg %p74
        %p208 = pneg %p71
        %p209 = pneg %p95
        %p210 = pneg %p92
        %p211 = scmp.lt.s32.totalorder %s23, 0
        %s212 = scalar_select %p211, %s23, 0
        %s213 = smul.addr %s212, 8
        %s214 = scalar_lea.vmem %s3, %s213
        %p215 = pneg %p121
        %p216 = pneg %p118
        %p217 = pneg %p149
        %p218 = pneg %p146
        %s219 = sand.u32 %s136, 1
        %s220 = scalar_lea.sflag [#allocation3], %s219
        %s221 = sand.u32 %s136, 1
        %s222 = smul.addr %s221, 8
        %s223 = scalar_lea.vmem [#allocation2], %s222
        %p224 = scmp.lt.s32.totalorder %s22, 1
        %s225 = scalar_select %p224, %s22, 1
        %p226 = scmp.lt.s32.totalorder %s23, 0
        %s227 = scalar_select %p226, %s23, 0
        %s228 = sadd.s32 %s227, %s225
        %s229 = smul.addr %s228, 8
        %s230 = scalar_lea.vmem %s0, %s229
        %p231 = scmp.lt.s32.totalorder %s23, 0
        %s232 = scalar_select %p231, %s23, 0
        %s233 = smul.addr %s232, 8
        %s234 = scalar_lea.vmem %s3, %s233
        %v236 = vld [vmem:[%s230] sm:$0xff]
        %v237 = vpack.c.bf16 %v236, %v236
        %v238 = vld [vmem:[%s1] sm:$0xf]
        %v239 = vld [vmem:[%s1 + $0x4] sm:$0xf]
        %v240 = vld [vmem:[%s1 + $0x8] sm:$0xf]
        %v241 = vld [vmem:[%s1 + $0xc] sm:$0xf]
        %v242 = vld [vmem:[%s1 + $0x10] sm:$0xf]
        %v243 = vld [vmem:[%s1 + $0x14] sm:$0xf]
        %v244 = vld [vmem:[%s1 + $0x18] sm:$0xf]
        %v245 = vld [vmem:[%s1 + $0x1c] sm:$0xf]
        %v246 = vld [vmem:[%s2] sm:$0x1]
        %v248 = vlaneseq
        %v249 = vshrl.u32 %v248, 7
        %v250 = vsub.s32 0, %v249
        %v251 = vrot.slane %v246, %v250
        %v261 = vunpack.c.l.b16 %v238
        %v262 = vunpack.c.l.b16 %v239
        %v263 = vunpack.c.l.b16 %v240
        %v264 = vunpack.c.l.b16 %v241
        %v265 = vunpack.c.l.b16 %v242
        %v266 = vunpack.c.l.b16 %v243
        %v267 = vunpack.c.l.b16 %v244
        %v268 = vunpack.c.l.b16 %v245
        %v269 = vpack.c.b16 %v262, %v261
        %v270 = vpack.c.b16 %v264, %v263
        %v271 = vpack.c.b16 %v266, %v265
        %v272 = vpack.c.b16 %v268, %v267
        %vm277 = vcmask 523264
        %v279 = vsel %vm277, %v237, 0
        %281 = vmatprep.subr.bf16.mxu0 0
        %282 = vmatpush1.bf16.msra.mxu0 %v269
        %283 = vmatprep.subr.bf16.mxu0 0
        %284 = vmatpush1.bf16.msra.mxu0 %v270
        %285 = vmatprep.subr.bf16.mxu0 0
        %286 = vmatpush1.bf16.msra.mxu0 %v271
        %287 = vmatprep.subr.bf16.mxu0 0
        %288 = vmatpush1.bf16.msra.mxu0 %v272
        %289 = vmatprep.subr.bf16.mxu0 0
        %290 = vmatpush1.bf16.msra.mxu0 0
        %291 = vmatprep.subr.bf16.mxu0 0
        %292 = vmatpush1.bf16.msra.mxu0 0
        %293 = vmatprep.subr.bf16.mxu0 0
        %294 = vmatpush1.bf16.msra.mxu0 0
        %295 = vmatprep.subr.bf16.mxu0 0
        %296 = vmatpush1.bf16.msra.mxu0 0
        %297 = vmatprep.subr.bf16.mxu0 0
        %298 = vmatpush1.bf16.msra.mxu0 0
        %299 = vmatprep.subr.bf16.mxu0 0
        %300 = vmatpush1.bf16.msra.mxu0 0
        %301 = vmatprep.subr.bf16.mxu0 0
        %302 = vmatpush1.bf16.msra.mxu0 0
        %303 = vmatprep.subr.bf16.mxu0 0
        %304 = vmatpush1.bf16.msra.mxu0 0
        %305 = vmatprep.subr.bf16.mxu0 0
        %306 = vmatpush1.bf16.msra.mxu0 0
        %307 = vmatprep.subr.bf16.mxu0 0
        %308 = vmatpush1.bf16.msra.mxu0 0
        %309 = vmatprep.subr.bf16.mxu0 0
        %310 = vmatpush1.bf16.msra.mxu0 0
        %311 = vmatprep.subr.bf16.mxu0 0
        %312 = vmatpush1.bf16.msra.mxu0 0
        %313 = vmatprep.mubr.bf16.mxu0 0
        %314 = vmatmul.mubr.bf16.gmra.mrb[0].mxu0 %v279
        %v315 = vpop.f32.mrb[0].mxu0
        %v316 = vadd.f32 %v251, %v315
        %v317 = vpop.f32.mrb[0].mxu0
        %v318 = vpop.f32.mrb[0].mxu0
        %v319 = vpop.f32.mrb[0].mxu0
        %320 = vdwg.mxu0
        %v321 = vld [vmem:[%s234] sm:$0xff]
        %v322 = vadd.f32 %v316, %v321
        %vm323 = vcmask 261120
        %324 = vst.msk [vmem:[%s223] sm:$0xff] %vm323, %v322
        %s325 = sand.u32 %s136, 1
        %s326 = scalar_lea.sflag [#allocation3], %s325
        %s327 = sand.u32 %s136, 1
        %s328 = smul.addr %s327, 8
        %s329 = scalar_lea.vmem [#allocation2], %s328
        // Predicated region
        $region37: #{tpu_custom_call.1} parent=35 // pred_check
          %p330 = pneg %p146
        $region38: #{tpu_custom_call.1} parent=35 // pred_check_branch
          %332 = sbr.rel (%p330) target = $region40
        $region39: #{tpu_custom_call.1} parent=35 // pred_region
          %s334 = ssub.s32 128, 128
          %335 = vsyncadd %s326, %s334
          %s336 = sadd.s32 %s23, %s22
          %s337 = smul.addr %s336, 128
          %s338 = scalar_lea.hbm %s4, %s337
          %s340 = sshll.u32 %s329, 4
          %s341 = int_to_ptr.vmem [resolvable:$true] %s340
          %343 = dma.vmem_to_hbm [thread:$0]  %s341, 128, %s338, %s326
        $region40: #{tpu_custom_call.1} parent=35 // pred_fallthru
          _
      $region36: #{tpu_custom_call.1} parent=5 // pred_fallthru
        _
      %p344 = scmp.le.s32.totalorder 2, %s13
      // Predicated region
      $region41: #{tpu_custom_call.1} parent=5 // pred_check
        %p345 = pneg %p344
      $region42: #{tpu_custom_call.1} parent=5 // pred_check_branch
        %347 = sbr.rel (%p345) target = $region44
      $region43: #{tpu_custom_call.1} parent=5 // pred_region
        %s348 = ssub.s32 %s13, 2
        // Predicated region
        $region45: #{tpu_custom_call.1} parent=43 // pred_check
          %p349 = pneg %p152
        $region46: #{tpu_custom_call.1} parent=43 // pred_check_branch
          %351 = sbr.rel (%p349) target = $region48
        $region47: #{tpu_custom_call.1} parent=43 // pred_region
          %s352 = sand.u32 %s137, 1
          %s353 = scalar_lea.sflag [#allocation3], %s352
          %s354 = sand.u32 %s137, 1
          %s355 = smul.addr %s354, 8
          %s356 = scalar_lea.vmem [#allocation2], %s355
          %357 = dma.done %s353, 128
        $region48: #{tpu_custom_call.1} parent=43 // pred_fallthru
          _
      $region44: #{tpu_custom_call.1} parent=5 // pred_fallthru
        _
    $region6: #{tpu_custom_call.1} parent=1 // loop_footer
      %s17 = sadd.s32 1, %s13
    $region7: #{tpu_custom_call.1} parent=1 // loop_footer_branch
      %12 = sbr.rel target = $region3
    $region8: #{tpu_custom_call.1} parent=1 // loop_exit
      _
    %358 = vsyncpa [#allocation3], 1
    %s359 = scalar_lea.sflag [#allocation3], 1
    %360 = vsyncpa %s359, 1

</llo_original>
